<compile_context>
chip_gen: v6e
topology: v6e:2x2x1
jax: 0.10.0
libtpu: 0.0.40
codegen_flags: <defaults>
</compile_context>

<pallas_src>
import functools

import jax
import jax.numpy as jnp
from jax.experimental import pallas as pl
from jax.experimental.pallas import tpu as pltpu

_LANE = 128
_SUBLANE = 8


def _round_up(n, m):
    return ((n + m - 1) // m) * m


def _policy_kernel(x_ref, w1_ref, b1_ref, wh_ref, bh_ref, out_ref, *, action_dim):
    # fc1 + ReLU (f32 accumulation regardless of operand dtype).
    x = x_ref[...]                                                       # (bm, S)
    h = jnp.dot(x, w1_ref[...], preferred_element_type=jnp.float32)      # (bm, H_pad)
    h = jnp.maximum(h + b1_ref[...], 0.0)

    # Fused mu/std head: single matmul over the padded (H_pad, N_pad) weight.
    h = h.astype(wh_ref.dtype)                                           # bf16 cast if requested
    z = jnp.dot(h, wh_ref[...], preferred_element_type=jnp.float32)      # (bm, N_pad)
    z = z + bh_ref[...]

    # Columns [0, A) -> 2*tanh, columns [A, N_pad) -> stable softplus; padding cols are
    # sliced away by the wrapper so their values do not matter.
    cols = jax.lax.broadcasted_iota(jnp.int32, z.shape, 1)
    mu = 2.0 * jnp.tanh(z)
    sp = jnp.maximum(z, 0.0) + jnp.log1p(jnp.exp(-jnp.abs(z)))
    out_ref[...] = jnp.where(cols < action_dim, mu, sp).astype(out_ref.dtype)


def _prepare_fused_params(params, compute_dtype):
    """Fuse the two heads and pad weights to lane-friendly shapes (done once, outside kernel)."""
    w1, b1 = params["w1"], params["b1"]
    w_mu, b_mu = params["w_mu"], params["b_mu"]
    w_std, b_std = params["w_std"], params["b_std"]
    S, H = w1.shape
    A = w_mu.shape[1]
    h_pad = _round_up(H, _LANE)
    n_pad = _round_up(2 * A, _LANE)

    w1p = jnp.zeros((S, h_pad), jnp.float32).at[:, :H].set(w1).astype(compute_dtype)
    b1p = jnp.zeros((1, h_pad), jnp.float32).at[:, :H].set(b1.reshape(1, H))

    w_heads = jnp.zeros((h_pad, n_pad), jnp.float32)
    w_heads = w_heads.at[:H, :A].set(w_mu).at[:H, A:2 * A].set(w_std)
    w_heads = w_heads.astype(compute_dtype)

    b_heads = jnp.zeros((1, n_pad), jnp.float32)
    b_heads = b_heads.at[:, :A].set(b_mu.reshape(1, A)).at[:, A:2 * A].set(b_std.reshape(1, A))
    return {"w1": w1p, "b1": b1p, "w_heads": w_heads, "b_heads": b_heads}


def policy_net_continuous(x, params, *, block_b=512, compute_dtype=jnp.float32):
    """x: (B, state_dim) float32.  params: (in,out)-layout weights, (1,out) biases.

    Returns (mu, std), each (B, action_dim) float32.
    compute_dtype=jnp.bfloat16 casts the matmul operands (recommended on v6e/v7x);
    accumulation and the activation tail stay in float32.
    """
    B, S = x.shape
    A = params["w_mu"].shape[1]
    fused = _prepare_fused_params(params, compute_dtype)
    n_pad = fused["w_heads"].shape[1]

    # Batch tile: multiple of the f32 sublane (8); pad B up so the grid divides evenly.
    bm = min(block_b, _round_up(B, _SUBLANE))
    b_padded = _round_up(B, bm)
    xp = x.astype(compute_dtype)
    if b_padded != B:
        xp = jnp.pad(xp, ((0, b_padded - B), (0, 0)))
    grid = (b_padded // bm,)

    out = pl.pallas_call(
        functools.partial(_policy_kernel, action_dim=A),
        out_shape=jax.ShapeDtypeStruct((b_padded, n_pad), jnp.float32),
        grid_spec=pltpu.PrefetchScalarGridSpec(
            num_scalar_prefetch=0,
            grid=grid,
            in_specs=[
                pl.BlockSpec((bm, S), lambda i: (i, 0)),                  # x tile (pipelined)
                pl.BlockSpec(fused["w1"].shape, lambda i: (0, 0)),        # weights stay resident
                pl.BlockSpec(fused["b1"].shape, lambda i: (0, 0)),
                pl.BlockSpec(fused["w_heads"].shape, lambda i: (0, 0)),
                pl.BlockSpec(fused["b_heads"].shape, lambda i: (0, 0)),
            ],
            out_specs=pl.BlockSpec((bm, n_pad), lambda i: (i, 0)),        # lane-dense output slab
        ),
        compiler_params=pltpu.CompilerParams(
            dimension_semantics=("parallel",),   # shard batch tiles across TCs on v7x
        ),
    )(xp, fused["w1"], fused["b1"], fused["w_heads"], fused["b_heads"])

    mu = out[:B, :A]
    std = out[:B, A:2 * A]
    return mu, std


def init_params(key, state_dim, hidden_dim, action_dim):
    """Deterministic init mimicking torch.nn.Linear default (U[-1/sqrt(fan_in), 1/sqrt(fan_in)]).
    Weights are stored as (in_features, out_features), biases as (1, out_features)."""
    ks = jax.random.split(key, 6)

    def lin(kw, kb, fan_in, fan_out):
        bound = 1.0 / jnp.sqrt(jnp.float32(fan_in))
        w = jax.random.uniform(kw, (fan_in, fan_out), jnp.float32, -bound, bound)
        b = jax.random.uniform(kb, (1, fan_out), jnp.float32, -bound, bound)
        return w, b

    w1, b1 = lin(ks[0], ks[1], state_dim, hidden_dim)
    w_mu, b_mu = lin(ks[2], ks[3], hidden_dim, action_dim)
    w_std, b_std = lin(ks[4], ks[5], hidden_dim, action_dim)
    return {"w1": w1, "b1": b1, "w_mu": w_mu, "b_mu": b_mu,
            "w_std": w_std, "b_std": b_std}


def _ref_forward(x, params):
    h = jnp.maximum(x @ params["w1"] + params["b1"], 0.0)
    mu = 2.0 * jnp.tanh(h @ params["w_mu"] + params["b_mu"])
    std = jax.nn.softplus(h @ params["w_std"] + params["b_std"])
    return mu, std


if __name__ == "__main__":
    # Small shapes consistent with the module: batch=8, state_dim=16, hidden=32, action_dim=4.
    B, STATE_DIM, HIDDEN_DIM, ACTION_DIM = 8, 16, 32, 4
    key = jax.random.PRNGKey(0)
    k_x, k_p, k_big = jax.random.split(key, 3)
    x = jax.random.normal(k_x, (B, STATE_DIM), jnp.float32)
    params = init_params(k_p, STATE_DIM, HIDDEN_DIM, ACTION_DIM)

    # f32 path (exact parity with the PyTorch forward semantics).
    mu, std = policy_net_continuous(x, params)
    jax.block_until_ready((mu, std))
    mu_ref, std_ref = _ref_forward(x, params)
    assert mu.shape == (B, ACTION_DIM) and std.shape == (B, ACTION_DIM)
    assert jnp.allclose(mu, mu_ref, atol=1e-5)
    assert jnp.allclose(std, std_ref, atol=1e-5)
    assert bool(jnp.all(std > 0.0))

    # Larger batch exercising the batch grid + parallel axis, bf16 matmul operands (v6e/v7x path).
    B2 = 256
    x2 = jax.random.normal(k_big, (B2, STATE_DIM), jnp.float32)
    mu2, std2 = policy_net_continuous(x2, params, block_b=128, compute_dtype=jnp.bfloat16)
    jax.block_until_ready((mu2, std2))
    mu2_ref, std2_ref = _ref_forward(x2, params)
    assert mu2.shape == (B2, ACTION_DIM) and std2.shape == (B2, ACTION_DIM)
    assert jnp.allclose(mu2, mu2_ref, atol=3e-2)
    assert jnp.allclose(std2, std2_ref, atol=3e-2)

    print("KERNEL_OK")
</pallas_src>

<mosaic_0001>
module attributes {stable_mosaic.version = 11 : i64} {
  func.func @_policy_kernel(%arg0: i32, %arg1: memref<8x16xf32, #tpu.memory_space<vmem>>, %arg2: memref<16x128xf32, #tpu.memory_space<vmem>>, %arg3: memref<1x128xf32, #tpu.memory_space<vmem>>, %arg4: memref<128x128xf32, #tpu.memory_space<vmem>>, %arg5: memref<1x128xf32, #tpu.memory_space<vmem>>, %arg6: memref<8x128xf32, #tpu.memory_space<vmem>>) attributes {dimension_semantics = [#tpu.dimension_semantics<parallel>], iteration_bounds = array<i64: 1>, scalar_prefetch = 0 : i64, scratch_operands = 0 : i64, tpu.core_type = #tpu.core_type<tc>, window_params = [{transform_indices = @transform_0, window_bounds = array<i64: 8, 16>}, {pipeline_mode = #tpu.pipeline_mode<synchronous>, transform_indices = @transform_1, window_bounds = array<i64: 16, 128>}, {pipeline_mode = #tpu.pipeline_mode<synchronous>, transform_indices = @transform_2, window_bounds = array<i64: 1, 128>}, {pipeline_mode = #tpu.pipeline_mode<synchronous>, transform_indices = @transform_3, window_bounds = array<i64: 128, 128>}, {pipeline_mode = #tpu.pipeline_mode<synchronous>, transform_indices = @transform_4, window_bounds = array<i64: 1, 128>}, {transform_indices = @transform_5, window_bounds = array<i64: 8, 128>}]} {
    %c0 = arith.constant 0 : index
    %c0_0 = arith.constant 0 : index
    %0 = vector.load %arg1[%c0, %c0_0] : memref<8x16xf32, #tpu.memory_space<vmem>>, vector<8x16xf32>
    %c0_1 = arith.constant 0 : index
    %c0_2 = arith.constant 0 : index
    %1 = vector.load %arg2[%c0_1, %c0_2] : memref<16x128xf32, #tpu.memory_space<vmem>>, vector<16x128xf32>
    %cst = arith.constant dense<0.000000e+00> : vector<8x128xf32>
    %2 = tpu.matmul %0, %1, %cst {dimension_numbers = #tpu.dot_dimension_numbers<[1], [0], [0], [1], [0, 0, 1, 1], [], []>} : vector<8x16xf32>, vector<16x128xf32>, vector<8x128xf32> -> vector<8x128xf32>
    %c0_3 = arith.constant 0 : index
    %c0_4 = arith.constant 0 : index
    %3 = vector.load %arg3[%c0_3, %c0_4] : memref<1x128xf32, #tpu.memory_space<vmem>>, vector<1x128xf32>
    %4 = vector.broadcast %3 : vector<1x128xf32> to vector<8x128xf32>
    %5 = arith.addf %2, %4 : vector<8x128xf32>
    %cst_5 = arith.constant 0.000000e+00 : f32
    %6 = vector.broadcast %cst_5 : f32 to vector<8x128xf32>
    %7 = arith.maximumf %5, %6 : vector<8x128xf32>
    %c0_6 = arith.constant 0 : index
    %c0_7 = arith.constant 0 : index
    %8 = vector.load %arg4[%c0_6, %c0_7] : memref<128x128xf32, #tpu.memory_space<vmem>>, vector<128x128xf32>
    %cst_8 = arith.constant dense<0.000000e+00> : vector<8x128xf32>
    %9 = tpu.matmul %7, %8, %cst_8 {dimension_numbers = #tpu.dot_dimension_numbers<[1], [0], [0], [1], [0, 0, 1, 1], [], []>} : vector<8x128xf32>, vector<128x128xf32>, vector<8x128xf32> -> vector<8x128xf32>
    %c0_9 = arith.constant 0 : index
    %c0_10 = arith.constant 0 : index
    %10 = vector.load %arg5[%c0_9, %c0_10] : memref<1x128xf32, #tpu.memory_space<vmem>>, vector<1x128xf32>
    %11 = vector.broadcast %10 : vector<1x128xf32> to vector<8x128xf32>
    %12 = arith.addf %9, %11 : vector<8x128xf32>
    %13 = tpu.iota {dimensions = array<i32: 1>} : vector<8x128xi32>
    %14 = math.tanh %12 : vector<8x128xf32>
    %cst_11 = arith.constant 2.000000e+00 : f32
    %15 = vector.broadcast %cst_11 : f32 to vector<8x128xf32>
    %16 = arith.mulf %15, %14 : vector<8x128xf32>
    %cst_12 = arith.constant 0.000000e+00 : f32
    %17 = vector.broadcast %cst_12 : f32 to vector<8x128xf32>
    %18 = arith.maximumf %12, %17 : vector<8x128xf32>
    %19 = math.absf %12 : vector<8x128xf32>
    %cst_13 = arith.constant 0.000000e+00 : f32
    %20 = vector.broadcast %cst_13 : f32 to vector<8x128xf32>
    %21 = arith.subf %20, %19 : vector<8x128xf32>
    %22 = math.exp %21 : vector<8x128xf32>
    %23 = math.log1p %22 : vector<8x128xf32>
    %24 = arith.addf %18, %23 : vector<8x128xf32>
    %c4_i32 = arith.constant 4 : i32
    %25 = vector.broadcast %c4_i32 : i32 to vector<8x128xi32>
    %26 = arith.cmpi slt, %13, %25 : vector<8x128xi32>
    %27 = arith.select %26, %16, %24 : vector<8x128xi1>, vector<8x128xf32>
    %c0_14 = arith.constant 0 : index
    %c0_15 = arith.constant 0 : index
    %28 = vector.load %arg6[%c0_14, %c0_15] : memref<8x128xf32, #tpu.memory_space<vmem>>, vector<8x128xf32>
    tpu.vector_store %arg6[%c0_14, %c0_15], %27 {strides = array<i32>} : memref<8x128xf32, #tpu.memory_space<vmem>>, vector<8x128xf32>,
    return
  }
  func.func @transform_0(%arg0: i32) -> (i32, i32) {
    %c0_i32 = arith.constant 0 : i32
    %c0_i32_0 = arith.constant 0 : i32
    return %arg0, %c0_i32 : i32, i32
  }
  func.func @transform_1(%arg0: i32) -> (i32, i32) {
    %c0_i32 = arith.constant 0 : i32
    %c0_i32_0 = arith.constant 0 : i32
    %c0_i32_1 = arith.constant 0 : i32
    return %c0_i32, %c0_i32_0 : i32, i32
  }
  func.func @transform_2(%arg0: i32) -> (i32, i32) {
    %c0_i32 = arith.constant 0 : i32
    %c0_i32_0 = arith.constant 0 : i32
    %c0_i32_1 = arith.constant 0 : i32
    return %c0_i32, %c0_i32_0 : i32, i32
  }
  func.func @transform_3(%arg0: i32) -> (i32, i32) {
    %c0_i32 = arith.constant 0 : i32
    %c0_i32_0 = arith.constant 0 : i32
    %c0_i32_1 = arith.constant 0 : i32
    return %c0_i32, %c0_i32_0 : i32, i32
  }
  func.func @transform_4(%arg0: i32) -> (i32, i32) {
    %c0_i32 = arith.constant 0 : i32
    %c0_i32_0 = arith.constant 0 : i32
    %c0_i32_1 = arith.constant 0 : i32
    return %c0_i32, %c0_i32_0 : i32, i32
  }
  func.func @transform_5(%arg0: i32) -> (i32, i32) {
    %c0_i32 = arith.constant 0 : i32
    %c0_i32_0 = arith.constant 0 : i32
    return %arg0, %c0_i32 : i32, i32
  }
}

</mosaic_0001>

<llo_original>
// kernel: tpu_custom_call.1
$region0: #{tpu_custom_call.1}
  #allocation0 [shape = 'u32[]', space=smem, size = 0x4, offset = 0x4, fixed_abs, tag = 'smem constant byte address 0x4 - core index']
  #allocation1 [shape = 'u32[144,128]{1,0:T(1,128)}', space=vmem, size = 0x12000, scoped, tag = 'internal scratch']
  %s0 = inlined_call_operand.hbm [shape: f32[8,16], index: 0, kind: input, shape index: {}]
  %s1 = inlined_call_operand.hbm [shape: f32[16,128], index: 1, kind: input, shape index: {}]
  %s2 = inlined_call_operand.vmem [shape: f32[1,128], index: 2, kind: input, shape index: {}]
  %s3 = inlined_call_operand.hbm [shape: f32[128,128], index: 3, kind: input, shape index: {}]
  %s4 = inlined_call_operand.vmem [shape: f32[1,128], index: 4, kind: input, shape index: {}]
  %s5 = inlined_call_operand.hbm [shape: f32[8,128], index: 5, kind: output, shape index: {}]
  %s6 = sld [smem:[#allocation0]]
  $region42: #{tpu_custom_call.1} parent=0
    _
  %s8 = ssub.s32 1, %s6
  %s9 = scalar_select 0, %s8, %s6
  $region1: #{tpu_custom_call.1} parent=0
    #allocation2 [shape = 'u8[4096]{0}', space=vmem, size = 0x1000, scoped, tag = 'input window, operand 0, single buffered']
    #allocation3 [shape = 's32[1]{0}', space=sflag, size = 0x4, scoped, tag = 'scoped memory for tpu_custom_call.1']
    #allocation4 [shape = 's32[1]{0}', space=sflag, size = 0x4, scoped, tag = 'scoped memory for tpu_custom_call.1']
    #allocation5 [shape = 'u8[8192]{0}', space=vmem, size = 0x2000, scoped, tag = 'input window, operand 1, single buffered']
    #allocation6 [shape = 's32[1]{0}', space=sflag, size = 0x4, scoped, tag = 'scoped memory for tpu_custom_call.1']
    #allocation7 [shape = 'u8[65536]{0}', space=vmem, size = 0x10000, scoped, tag = 'input window, operand 3, single buffered']
    #allocation8 [shape = 'u8[4096]{0}', space=vmem, size = 0x1000, scoped, tag = 'output window, operand 0, single buffered']
    %10 = vsyncpa [#allocation3], 0
    %11 = vsyncpa [#allocation6], 0
    %12 = vsyncpa [#allocation4], 0
    // Predicated region
    $region2: #{tpu_custom_call.1} parent=1 // pred_check
      _
    $region3: #{tpu_custom_call.1} parent=1 // pred_check_branch
      %14 = sbr.rel (0) target = $region5
    $region4: #{tpu_custom_call.1} parent=1 // pred_region
      %s16 = ssub.s32 128, 128
      %17 = vsyncadd [#allocation3], %s16
      %s19 = sshll.u32 [#allocation2], 4
      %s20 = int_to_ptr.vmem [resolvable:$true] %s19
      %22 = dma.hbm_to_vmem [thread:$0]  %s0, 128, %s20, [#allocation3]
    $region5: #{tpu_custom_call.1} parent=1 // pred_fallthru
      _
    // Predicated region
    $region6: #{tpu_custom_call.1} parent=1 // pred_check
      _
    $region7: #{tpu_custom_call.1} parent=1 // pred_check_branch
      %24 = sbr.rel (0) target = $region9
    $region8: #{tpu_custom_call.1} parent=1 // pred_region
      %s26 = ssub.s32 256, 256
      %27 = vsyncadd [#allocation6], %s26
      %s28 = sshll.u32 [#allocation5], 4
      %s29 = int_to_ptr.vmem [resolvable:$true] %s28
      %34 = dma.hbm_to_vmem [thread:$0]  %s1, 256, %s29, [#allocation6], 128, 128, 8
    $region9: #{tpu_custom_call.1} parent=1 // pred_fallthru
      _
    // Predicated region
    $region10: #{tpu_custom_call.1} parent=1 // pred_check
      _
    $region11: #{tpu_custom_call.1} parent=1 // pred_check_branch
      %36 = sbr.rel (0) target = $region13
    $region12: #{tpu_custom_call.1} parent=1 // pred_region
      _
    $region13: #{tpu_custom_call.1} parent=1 // pred_fallthru
      _
    // Predicated region
    $region14: #{tpu_custom_call.1} parent=1 // pred_check
      _
    $region15: #{tpu_custom_call.1} parent=1 // pred_check_branch
      %38 = sbr.rel (0) target = $region17
    $region16: #{tpu_custom_call.1} parent=1 // pred_region
      %s40 = ssub.s32 2048, 2048
      %41 = vsyncadd [#allocation6], %s40
      %s42 = sshll.u32 [#allocation7], 4
      %s43 = int_to_ptr.vmem [resolvable:$true] %s42
      %48 = dma.hbm_to_vmem [thread:$0]  %s3, 2048, %s43, [#allocation6], 128, 128, 8
    $region17: #{tpu_custom_call.1} parent=1 // pred_fallthru
      _
    // Predicated region
    $region18: #{tpu_custom_call.1} parent=1 // pred_check
      _
    $region19: #{tpu_custom_call.1} parent=1 // pred_check_branch
      %50 = sbr.rel (0) target = $region21
    $region20: #{tpu_custom_call.1} parent=1 // pred_region
      _
    $region21: #{tpu_custom_call.1} parent=1 // pred_fallthru
      _
    // Predicated region
    $region22: #{tpu_custom_call.1} parent=1 // pred_check
      _
    $region23: #{tpu_custom_call.1} parent=1 // pred_check_branch
      %52 = sbr.rel (0) target = $region25
    $region24: #{tpu_custom_call.1} parent=1 // pred_region
      %53 = dma.done [#allocation3], 128
    $region25: #{tpu_custom_call.1} parent=1 // pred_fallthru
      _
    // Predicated region
    $region26: #{tpu_custom_call.1} parent=1 // pred_check
      _
    $region27: #{tpu_custom_call.1} parent=1 // pred_check_branch
      %55 = sbr.rel (0) target = $region29
    $region28: #{tpu_custom_call.1} parent=1 // pred_region
      %56 = dma.done [#allocation6], 256
    $region29: #{tpu_custom_call.1} parent=1 // pred_fallthru
      _
    // Predicated region
    $region30: #{tpu_custom_call.1} parent=1 // pred_check
      _
    $region31: #{tpu_custom_call.1} parent=1 // pred_check_branch
      %58 = sbr.rel (0) target = $region33
    $region32: #{tpu_custom_call.1} parent=1 // pred_region
      %59 = dma.done [#allocation6], 2048
    $region33: #{tpu_custom_call.1} parent=1 // pred_fallthru
      _
    %v60 = vld [vmem:[#allocation2] sm:$0xff]
    %v61 = vld [vmem:[#allocation5] sm:$0xff]
    %v62 = vld [vmem:[#allocation5 + $0x8] sm:$0xff]
    %v63 = vld [vmem:[%s2] sm:$0x1]
    %v65 = vlaneseq
    %v66 = vshrl.u32 %v65, 7
    %v67 = vsub.s32 0, %v66
    %v68 = vrot.slane %v63, %v67
    %vm70 = vcmask 130048
    %v72 = vsel %vm70, %v60, 0
    %74 = vmatprep.subr.mxu0 0.0
    %75 = vmatpush1.msra.mxu0 0.0
    %76 = vmatprep.subr.mxu0 0.0
    %77 = vmatpush1.msra.mxu0 0.0
    %78 = vmatprep.subr.mxu0 0.0
    %79 = vmatpush1.msra.mxu0 0.0
    %80 = vmatprep.subr.mxu0 0.0
    %81 = vmatpush1.msra.mxu0 0.0
    %82 = vmatprep.subr.mxu0 0.0
    %83 = vmatpush1.msra.mxu0 0.0
    %84 = vmatprep.subr.mxu0 0.0
    %85 = vmatpush1.msra.mxu0 0.0
    %86 = vmatprep.subr.mxu0 0.0
    %87 = vmatpush1.msra.mxu0 0.0
    %88 = vmatprep.subr.mxu0 0.0
    %89 = vmatpush1.msra.mxu0 0.0
    %90 = vmatprep.subr.mxu0 0.0
    %91 = vmatpush1.msra.mxu0 0.0
    %92 = vmatprep.subr.mxu0 0.0
    %93 = vmatpush1.msra.mxu0 0.0
    %94 = vmatprep.subr.mxu0 0.0
    %95 = vmatpush1.msra.mxu0 0.0
    %96 = vmatprep.subr.mxu0 0.0
    %97 = vmatpush1.msra.mxu0 0.0
    %98 = vmatprep.subr.mxu0 0.0
    %99 = vmatpush1.msra.mxu0 0.0
    %100 = vmatprep.subr.mxu0 0.0
    %101 = vmatpush1.msra.mxu0 0.0
    %102 = vmatprep.subr.mxu0 0.0
    %103 = vmatpush1.msra.mxu0 %v62
    %104 = vmatprep.subr.mxu0 0.0
    %105 = vmatpush1.msra.mxu0 %v61
    %106 = vmatprep.subr.mxu0 0.0
    %107 = vmatpush2.msra.mxu0 0.0
    %108 = vmatprep.subr.mxu0 0.0
    %109 = vmatpush2.msra.mxu0 0.0
    %110 = vmatprep.subr.mxu0 0.0
    %111 = vmatpush2.msra.mxu0 0.0
    %112 = vmatprep.subr.mxu0 0.0
    %113 = vmatpush2.msra.mxu0 0.0
    %114 = vmatprep.subr.mxu0 0.0
    %115 = vmatpush2.msra.mxu0 0.0
    %116 = vmatprep.subr.mxu0 0.0
    %117 = vmatpush2.msra.mxu0 0.0
    %118 = vmatprep.subr.mxu0 0.0
    %119 = vmatpush2.msra.mxu0 0.0
    %120 = vmatprep.subr.mxu0 0.0
    %121 = vmatpush2.msra.mxu0 0.0
    %122 = vmatprep.subr.mxu0 0.0
    %123 = vmatpush2.msra.mxu0 0.0
    %124 = vmatprep.subr.mxu0 0.0
    %125 = vmatpush2.msra.mxu0 0.0
    %126 = vmatprep.subr.mxu0 0.0
    %127 = vmatpush2.msra.mxu0 0.0
    %128 = vmatprep.subr.mxu0 0.0
    %129 = vmatpush2.msra.mxu0 0.0
    %130 = vmatprep.subr.mxu0 0.0
    %131 = vmatpush2.msra.mxu0 0.0
    %132 = vmatprep.subr.mxu0 0.0
    %133 = vmatpush2.msra.mxu0 0.0
    %134 = vmatprep.subr.mxu0 0.0
    %135 = vmatpush2.msra.mxu0 0.0
    %136 = vmatprep.subr.mxu0 0.0
    %137 = vmatpush2.msra.mxu0 0.0
    %138 = vmatprep.mubr.f32.mxu0 0.0
    %139 = vmatmul.mubr.f32.gmra.mxu0 %v72
    %v140 = vpop.f32.mrf.mxu0
    %v141 = vadd.f32 %v68, %v140
    %v142 = vpop.f32.mrf.mxu0
    %143 = vdwg.mxu0
    %v144 = vmax.f32 %v141, 0.0
    %v145 = vld [vmem:[#allocation7] sm:$0xff]
    %v146 = vld [vmem:[#allocation7 + $0x8] sm:$0xff]
    %v147 = vld [vmem:[#allocation7 + $0x10] sm:$0xff]
    %v148 = vld [vmem:[#allocation7 + $0x18] sm:$0xff]
    %v149 = vld [vmem:[#allocation7 + $0x20] sm:$0xff]
    %v150 = vld [vmem:[#allocation7 + $0x28] sm:$0xff]
    %v151 = vld [vmem:[#allocation7 + $0x30] sm:$0xff]
    %v152 = vld [vmem:[#allocation7 + $0x38] sm:$0xff]
    %v153 = vld [vmem:[#allocation7 + $0x40] sm:$0xff]
    %v154 = vld [vmem:[#allocation7 + $0x48] sm:$0xff]
    %v155 = vld [vmem:[#allocation7 + $0x50] sm:$0xff]
    %v156 = vld [vmem:[#allocation7 + $0x58] sm:$0xff]
    %v157 = vld [vmem:[#allocation7 + $0x60] sm:$0xff]
    %v158 = vld [vmem:[#allocation7 + $0x68] sm:$0xff]
    %v159 = vld [vmem:[#allocation7 + $0x70] sm:$0xff]
    %v160 = vld [vmem:[#allocation7 + $0x78] sm:$0xff]
    %v161 = vld [vmem:[%s4] sm:$0x1]
    %v163 = vlaneseq
    %v164 = vshrl.u32 %v163, 7
    %v165 = vsub.s32 0, %v164
    %v166 = vrot.slane %v161, %v165
    %168 = vmatprep.subr.mxu0 0.0
    %169 = vmatpush1.msra.mxu0 %v160
    %170 = vmatprep.subr.mxu0 0.0
    %171 = vmatpush1.msra.mxu0 %v159
    %172 = vmatprep.subr.mxu0 0.0
    %173 = vmatpush1.msra.mxu0 %v158
    %174 = vmatprep.subr.mxu0 0.0
    %175 = vmatpush1.msra.mxu0 %v157
    %176 = vmatprep.subr.mxu0 0.0
    %177 = vmatpush1.msra.mxu0 %v156
    %178 = vmatprep.subr.mxu0 0.0
    %179 = vmatpush1.msra.mxu0 %v155
    %180 = vmatprep.subr.mxu0 0.0
    %181 = vmatpush1.msra.mxu0 %v154
    %182 = vmatprep.subr.mxu0 0.0
    %183 = vmatpush1.msra.mxu0 %v153
    %184 = vmatprep.subr.mxu0 0.0
    %185 = vmatpush1.msra.mxu0 %v152
    %186 = vmatprep.subr.mxu0 0.0
    %187 = vmatpush1.msra.mxu0 %v151
    %188 = vmatprep.subr.mxu0 0.0
    %189 = vmatpush1.msra.mxu0 %v150
    %190 = vmatprep.subr.mxu0 0.0
    %191 = vmatpush1.msra.mxu0 %v149
    %192 = vmatprep.subr.mxu0 0.0
    %193 = vmatpush1.msra.mxu0 %v148
    %194 = vmatprep.subr.mxu0 0.0
    %195 = vmatpush1.msra.mxu0 %v147
    %196 = vmatprep.subr.mxu0 0.0
    %197 = vmatpush1.msra.mxu0 %v146
    %198 = vmatprep.subr.mxu0 0.0
    %199 = vmatpush1.msra.mxu0 %v145
    %200 = vmatprep.subr.mxu0 0.0
    %201 = vmatpush2.msra.mxu0 0.0
    %202 = vmatprep.subr.mxu0 0.0
    %203 = vmatpush2.msra.mxu0 0.0
    %204 = vmatprep.subr.mxu0 0.0
    %205 = vmatpush2.msra.mxu0 0.0
    %206 = vmatprep.subr.mxu0 0.0
    %207 = vmatpush2.msra.mxu0 0.0
    %208 = vmatprep.subr.mxu0 0.0
    %209 = vmatpush2.msra.mxu0 0.0
    %210 = vmatprep.subr.mxu0 0.0
    %211 = vmatpush2.msra.mxu0 0.0
    %212 = vmatprep.subr.mxu0 0.0
    %213 = vmatpush2.msra.mxu0 0.0
    %214 = vmatprep.subr.mxu0 0.0
    %215 = vmatpush2.msra.mxu0 0.0
    %216 = vmatprep.subr.mxu0 0.0
    %217 = vmatpush2.msra.mxu0 0.0
    %218 = vmatprep.subr.mxu0 0.0
    %219 = vmatpush2.msra.mxu0 0.0
    %220 = vmatprep.subr.mxu0 0.0
    %221 = vmatpush2.msra.mxu0 0.0
    %222 = vmatprep.subr.mxu0 0.0
    %223 = vmatpush2.msra.mxu0 0.0
    %224 = vmatprep.subr.mxu0 0.0
    %225 = vmatpush2.msra.mxu0 0.0
    %226 = vmatprep.subr.mxu0 0.0
    %227 = vmatpush2.msra.mxu0 0.0
    %228 = vmatprep.subr.mxu0 0.0
    %229 = vmatpush2.msra.mxu0 0.0
    %230 = vmatprep.subr.mxu0 0.0
    %231 = vmatpush2.msra.mxu0 0.0
    %232 = vmatprep.mubr.f32.mxu0 0.0
    %233 = vmatmul.mubr.f32.gmra.mxu0 %v144
    %v234 = vpop.f32.mrf.mxu0
    %v235 = vadd.f32 %v166, %v234
    %v236 = vpop.f32.mrf.mxu0
    %237 = vdwg.mxu0
    %v238 = vlaneseq
    %v239 = vand.u32 %v238, 127
    %v240 = vtanh.pop %v235
    %v241 = vmul.f32 %v240, 2.0
    %v242 = vmax.f32 %v235, 0.0
    %v243 = vand.u32 2147483647, %v235
    %v244 = vsub.f32 0.0, %v243
    %v245 = vmul.f32 %v244, 1.442695
    %v246 = vpow.pop %v245
    %v247 = vadd.f32 %v246, 1.0
    %v248 = vlog2.pop %v247
    %v249 = vmul.f32 %v248, 0.6931472
    %v250 = vmul.f32 -0.5, %v246
    %v251 = vadd.f32 %v250, 1.0
    %v252 = vmul.f32 %v251, %v246
    %v253 = vand.u32 2147483647, %v246
    %vm254 = vcmp.lt.f32.partialorder %v253, 0.0004427343
    %v255 = vsel %vm254, %v252, %v249
    %v256 = vadd.f32 %v242, %v255
    %vm257 = vcmp.lt.s32.totalorder %v239, 4
    %v258 = vsel %vm257, %v241, %v256
    %259 = vst [vmem:[#allocation8] sm:$0xff] %v258
    // Predicated region
    $region34: #{tpu_custom_call.1} parent=1 // pred_check
      _
    $region35: #{tpu_custom_call.1} parent=1 // pred_check_branch
      %261 = sbr.rel (0) target = $region37
    $region36: #{tpu_custom_call.1} parent=1 // pred_region
      %s263 = ssub.s32 128, 128
      %264 = vsyncadd [#allocation4], %s263
      %s266 = sshll.u32 [#allocation8], 4
      %s267 = int_to_ptr.vmem [resolvable:$true] %s266
      %269 = dma.vmem_to_hbm [thread:$0]  %s267, 128, %s5, [#allocation4]
    $region37: #{tpu_custom_call.1} parent=1 // pred_fallthru
      _
    // Predicated region
    $region38: #{tpu_custom_call.1} parent=1 // pred_check
      _
    $region39: #{tpu_custom_call.1} parent=1 // pred_check_branch
      %271 = sbr.rel (0) target = $region41
    $region40: #{tpu_custom_call.1} parent=1 // pred_region
      %272 = dma.done [#allocation4], 128
    $region41: #{tpu_custom_call.1} parent=1 // pred_fallthru
      _
    %273 = vsyncpa [#allocation3], 1
    %274 = vsyncpa [#allocation6], 1
    %275 = vsyncpa [#allocation4], 1

</llo_original>
